<compile_context>
chip_gen: v6e
topology: v6e:2x2x1
jax: 0.10.0
libtpu: 0.0.40
codegen_flags: <defaults>
</compile_context>

<pallas_src>
import functools

import jax
import jax.numpy as jnp
from jax import lax
from jax.experimental import pallas as pl
from jax.experimental.pallas import tpu as pltpu

EPS_NORM = 1e-12          # F.normalize default eps
_EPS2 = EPS_NORM * EPS_NORM


def _fau_kernel(key_ref, query_ref, w_ref, shift_ref, out_ref, xcat_ref,
                *, bb, lat_dim, nk, nq):
    # key_ref:   (bb, C, nk) f32     query_ref: (bb, C, nq) f32
    # w_ref:     (2L, C)     f32     (eval-BN scale pre-folded, [W1; W2])
    # shift_ref: (2L, 1)     f32     ([b1; b2])
    # out_ref:   (bb, C, nq) f32
    # xcat_ref:  (C, nk+nq)  f32 VMEM scratch for the [key | query] slab
    w = w_ref[...]
    shift = shift_ref[...]

    def one_batch(bi):
        kb = key_ref[bi]                                     # (C, nk)
        qb = query_ref[bi]                                   # (C, nq)

        # Assemble [key | query] along lanes and run ONE fused 128-row MXU
        # pass computing both phi(key) and phi'(query) for this batch elem.
        xcat_ref[:, :nk] = kb
        xcat_ref[:, nk:] = qb
        phi = jnp.dot(w, xcat_ref[...],
                      preferred_element_type=jnp.float32)    # (2L, nk+nq)
        phi = jnp.maximum(phi + shift, 0.0)
        pk = phi[:lat_dim, :nk]                              # phi(key)    (L, nk)
        pq = phi[lat_dim:, nk:]                              # phi'(query) (L, nq)

        # F.normalize(graph_adj_v2l, dim=2): L2-normalize rows over nk.
        inv_a = lax.rsqrt(jnp.maximum(
            jnp.sum(pk * pk, axis=1, keepdims=True), _EPS2))
        pk_n = pk * inv_a

        # latent_nodes^T = key @ graph_adj_v2l^T -> (C, L); lanes = L.
        lat_t = lax.dot_general(kb, pk_n, (((1,), (1,)), ((), ())),
                                preferred_element_type=jnp.float32)

        # F.normalize(latent_nodes, dim=-1): norm over C (sublane reduce).
        inv_l = lax.rsqrt(jnp.maximum(
            jnp.sum(lat_t * lat_t, axis=0, keepdims=True), _EPS2))
        lat_n = lat_t * inv_l                                 # (C, L)

        # Gram of unit-norm columns is symmetric with entries in [-1, 1]:
        # affinity^T = softmax(Gram, axis=0); no max-subtraction needed.
        gram = lax.dot_general(lat_n, lat_n, (((0,), (0,)), ((), ())),
                               preferred_element_type=jnp.float32)  # (L, L)
        e = jnp.exp(gram)
        aff_t = e * pl.reciprocal(jnp.sum(e, axis=0, keepdims=True),
                                  approx=True)

        # latent2^T = latent^T @ affinity^T -> (C, L).
        lat2_t = jnp.dot(lat_t, aff_t, preferred_element_type=jnp.float32)

        # F.normalize(graph_adj_l2v, dim=1) is a per-column scale, folded
        # into a post-scale of the small (C, nq) product.
        inv_q = lax.rsqrt(jnp.maximum(
            jnp.sum(pq * pq, axis=0, keepdims=True), _EPS2))
        out_b = jnp.dot(lat2_t, pq,
                        preferred_element_type=jnp.float32) * inv_q

        # Full-tile store at lane offset 0 (no masked lane-offset stores).
        out_ref[bi] = out_b.astype(out_ref.dtype)

    if bb <= 4:                          # static unroll for small blocks
        for bi in range(bb):
            one_batch(bi)
    else:                                # bound live ranges for large blocks
        def body(bi, carry):
            one_batch(bi)
            return carry
        lax.fori_loop(0, bb, body, 0)


def _choose_batch_block(B, C, Nk, Nq, L):
    """Batch-block size: keep per-step bytes well under the smallest default
    scoped-VMEM limit (v5e: 16 MiB), prefer >= 2 grid steps (v7x dual TC),
    otherwise take the largest feasible block (no arbitrary cap)."""
    def step_bytes(bb):
        io = 2 * 4 * bb * C * (Nk + 2 * Nq)          # dbl-buffered in/out blocks
        wts = 4 * (2 * L * C + 2 * L)
        tmp = 4 * (C * (Nk + Nq) + 2 * L * (Nk + Nq) + L * Nk
                   + 3 * C * L + 2 * L * L + C * Nq)
        return io + wts + tmp

    budget = 8 * 1024 * 1024
    feasible = [d for d in range(1, B + 1)
                if B % d == 0 and step_bytes(d) <= budget]
    if not feasible:
        feasible = [1]
    multi = [d for d in feasible if B // d >= 2]
    bb = max(multi) if multi else max(feasible)
    return bb, step_bytes(bb)


def fau_forward(query, key, w_phi, bn1_scale, bn1_shift,
                w_phi_p, bn2_scale, bn2_shift):
    """query: (B,C,t,Hq,Wq), key: (B,C,t,Hk,Wk)  ->  (B,C,t,Hq,Wq)."""
    B, C, t, Hq, Wq = query.shape
    _, _, _, Hk, Wk = key.shape
    Nq = t * Hq * Wq
    Nk = t * Hk * Wk
    L = w_phi.shape[0]

    # Fold eval-mode BN scale into the conv weights and stack both convs
    # into one (2L, C) MXU operand; only the two shifts are shipped.
    w_fused = jnp.concatenate(
        [bn1_scale.reshape(L, 1) * w_phi,
         bn2_scale.reshape(L, 1) * w_phi_p], axis=0).astype(jnp.float32)
    shifts = jnp.concatenate(
        [bn1_shift.reshape(L, 1), bn2_shift.reshape(L, 1)],
        axis=0).astype(jnp.float32)

    # (B, C, N) views: contiguous reshapes only, no HBM transposes.
    k3 = key.reshape(B, C, Nk).astype(jnp.float32)
    q3 = query.reshape(B, C, Nq).astype(jnp.float32)

    bb, step_bytes = _choose_batch_block(B, C, Nk, Nq, L)
    nb = B // bb
    # TODO(synk): for B == 1 on v7x, add a second "parallel" grid axis over
    #             Nq column tiles so both TensorCores get work.

    vmem_limit = int(min(48 * 2**20, max(24 * 2**20, 4 * step_bytes)))

    def kq_spec(shape, imap):
        if nb >= 4:        # deeper buffering only pays on long grids
            return pl.BlockSpec(shape, imap, pipeline_mode=pl.Buffered(3))
        return pl.BlockSpec(shape, imap)

    conv_fl = 2 * (2 * L) * C * (Nk + Nq)
    lat_fl = 2 * C * L * Nk
    gram_fl = 2 * L * L * C
    lat2_fl = 2 * C * L * L
    out_fl = 2 * C * L * Nq
    flops = B * (conv_fl + lat_fl + gram_fl + lat2_fl + out_fl)
    transcendentals = B * (L * L + 2 * L + Nq + 1)
    bytes_accessed = 4 * (B * C * (Nk + 2 * Nq) + 2 * L * C + 2 * L)

    kernel = functools.partial(_fau_kernel, bb=bb, lat_dim=L, nk=Nk, nq=Nq)
    out3 = pl.pallas_call(
        kernel,
        out_shape=jax.ShapeDtypeStruct((B, C, Nq), jnp.float32),
        grid_spec=pltpu.PrefetchScalarGridSpec(
            num_scalar_prefetch=0,
            grid=(nb,),
            in_specs=[
                kq_spec((bb, C, Nk), lambda i: (i, 0, 0)),    # key block
                kq_spec((bb, C, Nq), lambda i: (i, 0, 0)),    # query block
                pl.BlockSpec((2 * L, C), lambda i: (0, 0)),   # fused conv W
                pl.BlockSpec((2 * L, 1), lambda i: (0, 0)),   # fused BN shifts
            ],
            out_specs=pl.BlockSpec((bb, C, Nq), lambda i: (i, 0, 0)),
            scratch_shapes=[pltpu.VMEM((C, Nk + Nq), jnp.float32)],
        ),
        compiler_params=pltpu.CompilerParams(
            dimension_semantics=("parallel",),
            vmem_limit_bytes=vmem_limit),
        cost_estimate=pl.CostEstimate(
            flops=flops, transcendentals=transcendentals,
            bytes_accessed=bytes_accessed),
    )(k3, q3, w_fused, shifts)

    return out3.reshape(B, C, t, Hq, Wq)


def _reference_forward(query, key, w1, b1, w2, b2):
    """Pure-JAX replica of the PyTorch forward with eval-mode BN folded into
    (w, b):  phi(x) = relu(w @ x + b)."""
    B, C, t, Hq, Wq = query.shape
    _, _, _, Hk, Wk = key.shape
    Nq, Nk = t * Hq * Wq, t * Hk * Wk
    q2 = query.reshape(B, C, Nq)
    k2 = key.reshape(B, C, Nk)

    phi_k = jnp.maximum(jnp.einsum('lc,bcn->bln', w1, k2) + b1[None], 0.0)
    phi_k = phi_k / jnp.maximum(
        jnp.linalg.norm(phi_k, axis=2, keepdims=True), EPS_NORM)
    latent = jnp.einsum('bln,bcn->blc', phi_k, k2)
    lat_n = latent / jnp.maximum(
        jnp.linalg.norm(latent, axis=-1, keepdims=True), EPS_NORM)
    aff = jax.nn.softmax(jnp.einsum('blc,bmc->blm', lat_n, lat_n), axis=-1)
    latent = jnp.einsum('blm,bmc->blc', aff, latent)

    phi_q = jnp.maximum(jnp.einsum('lc,bcn->bln', w2, q2) + b2[None], 0.0)
    phi_q = phi_q / jnp.maximum(
        jnp.linalg.norm(phi_q, axis=1, keepdims=True), EPS_NORM)
    out = jnp.einsum('blc,bln->bcn', latent, phi_q)
    return out.reshape(B, C, t, Hq, Wq)


if __name__ == "__main__":
    B, C, L = 2, 8, 64           # kq_channels=8, latent_dim=64
    t, Hk, Wk = 2, 8, 8          # key spatial
    Hq, Wq = 4, 8                # query spatial

    root = jax.random.PRNGKey(0)
    k_key, k_query, k_w1, k_w2, k_g1, k_g2 = jax.random.split(root, 6)

    key_feature = jax.random.normal(k_key, (B, C, t, Hk, Wk), jnp.float32)
    query_feature = jax.random.normal(k_query, (B, C, t, Hq, Wq), jnp.float32)

    # Conv3d 1x1x1 weights (L, C)
    w_phi = jax.random.normal(k_w1, (L, C), jnp.float32) * 0.1
    w_phi_p = jax.random.normal(k_w2, (L, C), jnp.float32) * 0.1

    # Deterministic eval-mode BatchNorm3d parameters per latent channel
    eps_bn = 1e-5
    gamma1 = 1.0 + 0.05 * jax.random.normal(k_g1, (L,), jnp.float32)
    beta1 = 0.01 * jnp.arange(L, dtype=jnp.float32)
    mean1 = 0.02 * jnp.arange(L, dtype=jnp.float32)
    var1 = 1.0 + 0.1 * (jnp.arange(L, dtype=jnp.float32) / L)
    gamma2 = 1.0 + 0.05 * jax.random.normal(k_g2, (L,), jnp.float32)
    beta2 = -0.01 * jnp.arange(L, dtype=jnp.float32)
    mean2 = -0.02 * jnp.arange(L, dtype=jnp.float32)
    var2 = 1.0 + 0.2 * (jnp.arange(L, dtype=jnp.float32) / L)

    s1 = (gamma1 / jnp.sqrt(var1 + eps_bn)).reshape(L, 1)
    b1 = (beta1 - mean1 * gamma1 / jnp.sqrt(var1 + eps_bn)).reshape(L, 1)
    s2 = (gamma2 / jnp.sqrt(var2 + eps_bn)).reshape(L, 1)
    b2 = (beta2 - mean2 * gamma2 / jnp.sqrt(var2 + eps_bn)).reshape(L, 1)

    out = fau_forward(query_feature, key_feature, w_phi, s1, b1,
                      w_phi_p, s2, b2)
    out = jax.block_until_ready(out)

    # Reference with the same folded (w, b); everything stays f32.
    w1_eff = s1 * w_phi
    w2_eff = s2 * w_phi_p
    ref = _reference_forward(query_feature, key_feature, w1_eff, b1,
                             w2_eff, b2)

    assert out.shape == (B, C, t, Hq, Wq)
    assert bool(jnp.all(jnp.isfinite(out)))
    assert bool(jnp.allclose(out, ref, rtol=2e-2, atol=2e-2))

    print("KERNEL_OK")
</pallas_src>

<mosaic_0001>
module attributes {stable_mosaic.version = 11 : i64} {
  func.func @_fau_kernel(%arg0: i32, %arg1: memref<1x8x128xf32, #tpu.memory_space<vmem>>, %arg2: memref<1x8x64xf32, #tpu.memory_space<vmem>>, %arg3: memref<128x8xf32, #tpu.memory_space<vmem>>, %arg4: memref<128x1xf32, #tpu.memory_space<vmem>>, %arg5: memref<1x8x64xf32, #tpu.memory_space<vmem>>, %arg6: memref<8x192xf32, #tpu.memory_space<vmem>>) attributes {dimension_semantics = [#tpu.dimension_semantics<parallel>], iteration_bounds = array<i64: 2>, scalar_prefetch = 0 : i64, scratch_operands = 1 : i64, tpu.core_type = #tpu.core_type<tc>, window_params = [{transform_indices = @transform_0, window_bounds = array<i64: 1, 8, 128>}, {transform_indices = @transform_1, window_bounds = array<i64: 1, 8, 64>}, {pipeline_mode = #tpu.pipeline_mode<synchronous>, transform_indices = @transform_2, window_bounds = array<i64: 128, 8>}, {pipeline_mode = #tpu.pipeline_mode<synchronous>, transform_indices = @transform_3, window_bounds = array<i64: 128, 1>}, {transform_indices = @transform_4, window_bounds = array<i64: 1, 8, 64>}]} {
    %c0 = arith.constant 0 : index
    %c0_0 = arith.constant 0 : index
    %0 = vector.load %arg3[%c0, %c0_0] : memref<128x8xf32, #tpu.memory_space<vmem>>, vector<128x8xf32>
    %c0_1 = arith.constant 0 : index
    %c0_2 = arith.constant 0 : index
    %1 = vector.load %arg4[%c0_1, %c0_2] : memref<128x1xf32, #tpu.memory_space<vmem>>, vector<128x1xf32>
    %c0_3 = arith.constant 0 : index
    %c0_4 = arith.constant 0 : index
    %c0_5 = arith.constant 0 : index
    %2 = vector.load %arg1[%c0_3, %c0_4, %c0_5] : memref<1x8x128xf32, #tpu.memory_space<vmem>>, vector<1x8x128xf32>
    %3 = vector.shape_cast %2 : vector<1x8x128xf32> to vector<8x128xf32>
    %c0_6 = arith.constant 0 : index
    %c0_7 = arith.constant 0 : index
    %c0_8 = arith.constant 0 : index
    %4 = vector.load %arg2[%c0_6, %c0_7, %c0_8] : memref<1x8x64xf32, #tpu.memory_space<vmem>>, vector<1x8x64xf32>
    %5 = vector.shape_cast %4 : vector<1x8x64xf32> to vector<8x64xf32>
    %c0_9 = arith.constant 0 : index
    %c0_10 = arith.constant 0 : index
    %6 = vector.load %arg6[%c0_9, %c0_10] : memref<8x192xf32, #tpu.memory_space<vmem>>, vector<8x128xf32>
    tpu.vector_store %arg6[%c0_9, %c0_10], %3 {strides = array<i32>} : memref<8x192xf32, #tpu.memory_space<vmem>>, vector<8x128xf32>,
    %c0_11 = arith.constant 0 : index
    %c128 = arith.constant 128 : index
    %7 = vector.load %arg6[%c0_11, %c128] : memref<8x192xf32, #tpu.memory_space<vmem>>, vector<8x64xf32>
    tpu.vector_store %arg6[%c0_11, %c128], %5 {strides = array<i32>} : memref<8x192xf32, #tpu.memory_space<vmem>>, vector<8x64xf32>,
    %c0_12 = arith.constant 0 : index
    %c0_13 = arith.constant 0 : index
    %8 = vector.load %arg6[%c0_12, %c0_13] : memref<8x192xf32, #tpu.memory_space<vmem>>, vector<8x192xf32>
    %cst = arith.constant dense<0.000000e+00> : vector<128x192xf32>
    %9 = tpu.matmul %0, %8, %cst {dimension_numbers = #tpu.dot_dimension_numbers<[1], [0], [0], [1], [0, 0, 1, 1], [], []>} : vector<128x8xf32>, vector<8x192xf32>, vector<128x192xf32> -> vector<128x192xf32>
    %10 = vector.broadcast %1 : vector<128x1xf32> to vector<128x192xf32>
    %11 = arith.addf %9, %10 : vector<128x192xf32>
    %cst_14 = arith.constant 0.000000e+00 : f32
    %12 = vector.broadcast %cst_14 : f32 to vector<128x192xf32>
    %13 = arith.maximumf %11, %12 : vector<128x192xf32>
    %14 = vector.extract_strided_slice %13 {offsets = [0, 0], sizes = [64, 128], strides = [1, 1]} : vector<128x192xf32> to vector<64x128xf32>
    %15 = vector.extract_strided_slice %13 {offsets = [64, 128], sizes = [64, 64], strides = [1, 1]} : vector<128x192xf32> to vector<64x64xf32>
    %16 = arith.mulf %14, %14 : vector<64x128xf32>
    %cst_15 = arith.constant dense<0.000000e+00> : vector<64xf32>
    %17 = vector.multi_reduction <add>, %16, %cst_15 [1] : vector<64x128xf32> to vector<64xf32>
    %18 = vector.shape_cast %17 : vector<64xf32> to vector<64x1xf32>
    %cst_16 = arith.constant 1.000000e-24 : f32
    %19 = vector.broadcast %cst_16 : f32 to vector<64x1xf32>
    %20 = arith.maximumf %18, %19 : vector<64x1xf32>
    %21 = math.rsqrt %20 : vector<64x1xf32>
    %22 = vector.broadcast %21 : vector<64x1xf32> to vector<64x128xf32>
    %23 = arith.mulf %14, %22 : vector<64x128xf32>
    %cst_17 = arith.constant dense<0.000000e+00> : vector<8x64xf32>
    %24 = tpu.matmul %3, %23, %cst_17 {dimension_numbers = #tpu.dot_dimension_numbers<[1], [1], [0], [0], [0, 0, 1, 0], [], []>} : vector<8x128xf32>, vector<64x128xf32>, vector<8x64xf32> -> vector<8x64xf32>
    %25 = arith.mulf %24, %24 : vector<8x64xf32>
    %cst_18 = arith.constant dense<0.000000e+00> : vector<64xf32>
    %26 = vector.multi_reduction <add>, %25, %cst_18 [0] : vector<8x64xf32> to vector<64xf32>
    %27 = vector.shape_cast %26 : vector<64xf32> to vector<1x64xf32>
    %cst_19 = arith.constant 1.000000e-24 : f32
    %28 = vector.broadcast %cst_19 : f32 to vector<1x64xf32>
    %29 = arith.maximumf %27, %28 : vector<1x64xf32>
    %30 = math.rsqrt %29 : vector<1x64xf32>
    %31 = vector.broadcast %30 : vector<1x64xf32> to vector<8x64xf32>
    %32 = arith.mulf %24, %31 : vector<8x64xf32>
    %cst_20 = arith.constant dense<0.000000e+00> : vector<64x64xf32>
    %33 = tpu.matmul %32, %32, %cst_20 {dimension_numbers = #tpu.dot_dimension_numbers<[0], [0], [1], [1], [0, 1, 1, 1], [], []>} : vector<8x64xf32>, vector<8x64xf32>, vector<64x64xf32> -> vector<64x64xf32>
    %34 = math.exp %33 : vector<64x64xf32>
    %cst_21 = arith.constant dense<0.000000e+00> : vector<64xf32>
    %35 = vector.multi_reduction <add>, %34, %cst_21 [0] : vector<64x64xf32> to vector<64xf32>
    %36 = vector.shape_cast %35 : vector<64xf32> to vector<1x64xf32>
    %37 = tpu.reciprocal %36 {approx = true} : vector<1x64xf32> -> vector<1x64xf32>
    %38 = vector.broadcast %37 : vector<1x64xf32> to vector<64x64xf32>
    %39 = arith.mulf %34, %38 : vector<64x64xf32>
    %cst_22 = arith.constant dense<0.000000e+00> : vector<8x64xf32>
    %40 = tpu.matmul %24, %39, %cst_22 {dimension_numbers = #tpu.dot_dimension_numbers<[1], [0], [0], [1], [0, 0, 1, 1], [], []>} : vector<8x64xf32>, vector<64x64xf32>, vector<8x64xf32> -> vector<8x64xf32>
    %41 = arith.mulf %15, %15 : vector<64x64xf32>
    %cst_23 = arith.constant dense<0.000000e+00> : vector<64xf32>
    %42 = vector.multi_reduction <add>, %41, %cst_23 [0] : vector<64x64xf32> to vector<64xf32>
    %43 = vector.shape_cast %42 : vector<64xf32> to vector<1x64xf32>
    %cst_24 = arith.constant 1.000000e-24 : f32
    %44 = vector.broadcast %cst_24 : f32 to vector<1x64xf32>
    %45 = arith.maximumf %43, %44 : vector<1x64xf32>
    %46 = math.rsqrt %45 : vector<1x64xf32>
    %cst_25 = arith.constant dense<0.000000e+00> : vector<8x64xf32>
    %47 = tpu.matmul %40, %15, %cst_25 {dimension_numbers = #tpu.dot_dimension_numbers<[1], [0], [0], [1], [0, 0, 1, 1], [], []>} : vector<8x64xf32>, vector<64x64xf32>, vector<8x64xf32> -> vector<8x64xf32>
    %48 = vector.broadcast %46 : vector<1x64xf32> to vector<8x64xf32>
    %49 = arith.mulf %47, %48 : vector<8x64xf32>
    %c0_26 = arith.constant 0 : index
    %c0_27 = arith.constant 0 : index
    %c0_28 = arith.constant 0 : index
    %50 = vector.load %arg5[%c0_26, %c0_27, %c0_28] : memref<1x8x64xf32, #tpu.memory_space<vmem>>, vector<1x8x64xf32>
    %51 = vector.shape_cast %50 : vector<1x8x64xf32> to vector<8x64xf32>
    %52 = vector.shape_cast %49 : vector<8x64xf32> to vector<1x8x64xf32>
    tpu.vector_store %arg5[%c0_26, %c0_27, %c0_28], %52 {strides = array<i32>} : memref<1x8x64xf32, #tpu.memory_space<vmem>>, vector<1x8x64xf32>,
    return
  }
  func.func @transform_0(%arg0: i32) -> (i32, i32, i32) {
    %c0_i32 = arith.constant 0 : i32
    %c0_i32_0 = arith.constant 0 : i32
    %c0_i32_1 = arith.constant 0 : i32
    return %arg0, %c0_i32, %c0_i32_0 : i32, i32, i32
  }
  func.func @transform_1(%arg0: i32) -> (i32, i32, i32) {
    %c0_i32 = arith.constant 0 : i32
    %c0_i32_0 = arith.constant 0 : i32
    %c0_i32_1 = arith.constant 0 : i32
    return %arg0, %c0_i32, %c0_i32_0 : i32, i32, i32
  }
  func.func @transform_2(%arg0: i32) -> (i32, i32) {
    %c0_i32 = arith.constant 0 : i32
    %c0_i32_0 = arith.constant 0 : i32
    %c0_i32_1 = arith.constant 0 : i32
    return %c0_i32, %c0_i32_0 : i32, i32
  }
  func.func @transform_3(%arg0: i32) -> (i32, i32) {
    %c0_i32 = arith.constant 0 : i32
    %c0_i32_0 = arith.constant 0 : i32
    %c0_i32_1 = arith.constant 0 : i32
    return %c0_i32, %c0_i32_0 : i32, i32
  }
  func.func @transform_4(%arg0: i32) -> (i32, i32, i32) {
    %c0_i32 = arith.constant 0 : i32
    %c0_i32_0 = arith.constant 0 : i32
    %c0_i32_1 = arith.constant 0 : i32
    return %arg0, %c0_i32, %c0_i32_0 : i32, i32, i32
  }
}

</mosaic_0001>

<llo_original>
// kernel: tpu_custom_call.1
$region0: #{tpu_custom_call.1}
  #allocation0 [shape = 'u32[]', space=smem, size = 0x4, offset = 0x4, fixed_abs, tag = 'smem constant byte address 0x4 - core index']
  #allocation1 [shape = 'u32[144,128]{1,0:T(1,128)}', space=vmem, size = 0x12000, scoped, tag = 'internal scratch']
  #allocation2 [shape = 'f32[8,192]{1,0:T(8,128)}', space=vmem, size = 0x2000, scoped, tag = 'scratch operand']
  %s0 = inlined_call_operand.vmem [shape: f32[2,8,128], index: 0, kind: input, shape index: {}]
  %s1 = inlined_call_operand.vmem [shape: f32[2,8,64], index: 1, kind: input, shape index: {}]
  %s2 = inlined_call_operand.vmem [shape: f32[128,8], index: 2, kind: input, shape index: {}]
  %s3 = inlined_call_operand.vmem [shape: f32[128,1], index: 3, kind: input, shape index: {}]
  %s4 = inlined_call_operand.hbm [shape: f32[2,8,64], index: 4, kind: output, shape index: {}]
  %s5 = sld [smem:[#allocation0]]
  $region49: #{tpu_custom_call.1} parent=0
    _
  %s7 = ssub.s32 1, %s5
  %s8 = scalar_select 0, %s7, %s5
  $region1: #{tpu_custom_call.1} parent=0
    #allocation3 [shape = 'u8[8192]{0}', space=vmem, size = 0x2000, scoped, tag = 'output window, operand 0']
    #allocation4 [shape = 's32[2]{0}', space=sflag, size = 0x8, scoped, tag = 'scoped memory for tpu_custom_call.1']
    %9 = vsyncpa [#allocation4], 0
    %s10 = scalar_lea.sflag [#allocation4], 1
    %11 = vsyncpa %s10, 0
    loop: start=0, step=1, limit=4
    $region2: #{tpu_custom_call.1} parent=1 // loop_pre_header
      _
    $region3: #{tpu_custom_call.1} parent=1 // loop_header
      %s13 = sphi 0, %s17
      %p14 = scmp.ge.s32.totalorder %s13, 4
      %s23 = sphi 0, %s25
      %s26 = sphi 0, %s23
      %s27 = sphi 0, %s26
      %s43 = sphi 0, %s27
      %s49 = sphi 0, %s51
      %s52 = sphi 0, %s49
      %s53 = sphi 0, %s52
      %s69 = sphi 0, %s53
      %s73 = sphi 0, %s73
      %s75 = sphi 0, %s73
      %s76 = sphi 0, %s75
      %s90 = sphi 0, %s76
      %s94 = sphi 0, %s94
      %s96 = sphi 0, %s94
      %s97 = sphi 0, %s96
      %s111 = sphi 0, %s97
      %s117 = sphi 0, %s119
      %s120 = sphi 0, %s117
      %s121 = sphi 0, %s120
      %s137 = sphi 0, %s121
    $region4: #{tpu_custom_call.1} parent=1 // loop_header_branch
      %16 = sbr.rel (%p14) target = $region8
    $region5: #{tpu_custom_call.1} parent=1 // loop_body
      %s18 = ssub.s32 %s13, 1
      %s19 = ssub.s32 %s13, 2
      %s20 = sadd.s32 %s13, 1
      %s21 = ssub.s32 %s13, %s20
      %p22 = scmp.eq.s32.totalorder %s21, 0
      %s24 = sadd.s32 %s23, 1
      %s25 = scalar_select %p22, %s23, %s24
      %p28 = pneg %p22
      %p29 = scmp.eq.s32.totalorder %s13, 1
      %p30 = por %p28, %p29
      %p31 = scmp.ne.s32.totalorder %s23, %s26
      %p32 = scmp.eq.s32.totalorder %s13, 0
      %p33 = por %p31, %p32
      %p34 = scmp.ne.s32.totalorder %s23, %s26
      %p35 = scmp.eq.s32.totalorder %s18, 1
      %p36 = por %p34, %p35
      %p37 = scmp.ne.s32.totalorder %s26, %s27
      %p38 = scmp.eq.s32.totalorder %s18, 0
      %p39 = por %p37, %p38
      %p40 = scmp.ne.s32.totalorder %s26, %s27
      %p41 = scmp.eq.s32.totalorder %s19, 1
      %p42 = por %p40, %p41
      %p44 = scmp.ne.s32.totalorder %s27, %s43
      %p45 = scmp.eq.s32.totalorder %s19, 0
      %p46 = por %p44, %p45
      %s47 = ssub.s32 %s13, %s20
      %p48 = scmp.eq.s32.totalorder %s47, 0
      %s50 = sadd.s32 %s49, 1
      %s51 = scalar_select %p48, %s49, %s50
      %p54 = pneg %p48
      %p55 = scmp.eq.s32.totalorder %s13, 1
      %p56 = por %p54, %p55
      %p57 = scmp.ne.s32.totalorder %s49, %s52
      %p58 = scmp.eq.s32.totalorder %s13, 0
      %p59 = por %p57, %p58
      %p60 = scmp.ne.s32.totalorder %s49, %s52
      %p61 = scmp.eq.s32.totalorder %s18, 1
      %p62 = por %p60, %p61
      %p63 = scmp.ne.s32.totalorder %s52, %s53
      %p64 = scmp.eq.s32.totalorder %s18, 0
      %p65 = por %p63, %p64
      %p66 = scmp.ne.s32.totalorder %s52, %s53
      %p67 = scmp.eq.s32.totalorder %s19, 1
      %p68 = por %p66, %p67
      %p70 = scmp.ne.s32.totalorder %s53, %s69
      %p71 = scmp.eq.s32.totalorder %s19, 0
      %p72 = por %p70, %p71
      %s74 = sadd.s32 %s73, 1
      %p77 = scmp.eq.s32.totalorder %s13, 1
      %p78 = scmp.ne.s32.totalorder %s73, %s75
      %p79 = scmp.eq.s32.totalorder %s13, 0
      %p80 = por %p78, %p79
      %p81 = scmp.ne.s32.totalorder %s73, %s75
      %p82 = scmp.eq.s32.totalorder %s18, 1
      %p83 = por %p81, %p82
      %p84 = scmp.ne.s32.totalorder %s75, %s76
      %p85 = scmp.eq.s32.totalorder %s18, 0
      %p86 = por %p84, %p85
      %p87 = scmp.ne.s32.totalorder %s75, %s76
      %p88 = scmp.eq.s32.totalorder %s19, 1
      %p89 = por %p87, %p88
      %p91 = scmp.ne.s32.totalorder %s76, %s90
      %p92 = scmp.eq.s32.totalorder %s19, 0
      %p93 = por %p91, %p92
      %s95 = sadd.s32 %s94, 1
      %p98 = scmp.eq.s32.totalorder %s13, 1
      %p99 = scmp.ne.s32.totalorder %s94, %s96
      %p100 = scmp.eq.s32.totalorder %s13, 0
      %p101 = por %p99, %p100
      %p102 = scmp.ne.s32.totalorder %s94, %s96
      %p103 = scmp.eq.s32.totalorder %s18, 1
      %p104 = por %p102, %p103
      %p105 = scmp.ne.s32.totalorder %s96, %s97
      %p106 = scmp.eq.s32.totalorder %s18, 0
      %p107 = por %p105, %p106
      %p108 = scmp.ne.s32.totalorder %s96, %s97
      %p109 = scmp.eq.s32.totalorder %s19, 1
      %p110 = por %p108, %p109
      %p112 = scmp.ne.s32.totalorder %s97, %s111
      %p113 = scmp.eq.s32.totalorder %s19, 0
      %p114 = por %p112, %p113
      %s115 = ssub.s32 %s13, %s20
      %p116 = scmp.eq.s32.totalorder %s115, 0
      %s118 = sadd.s32 %s117, 1
      %s119 = scalar_select %p116, %s117, %s118
      %p122 = pneg %p116
      %p123 = scmp.eq.s32.totalorder %s13, 1
      %p124 = por %p122, %p123
      %p125 = scmp.ne.s32.totalorder %s117, %s120
      %p126 = scmp.eq.s32.totalorder %s13, 0
      %p127 = por %p125, %p126
      %p128 = scmp.ne.s32.totalorder %s117, %s120
      %p129 = scmp.eq.s32.totalorder %s18, 1
      %p130 = por %p128, %p129
      %p131 = scmp.ne.s32.totalorder %s120, %s121
      %p132 = scmp.eq.s32.totalorder %s18, 0
      %p133 = por %p131, %p132
      %p134 = scmp.ne.s32.totalorder %s120, %s121
      %p135 = scmp.eq.s32.totalorder %s19, 1
      %p136 = por %p134, %p135
      %p138 = scmp.ne.s32.totalorder %s121, %s137
      %p139 = scmp.eq.s32.totalorder %s19, 0
      %p140 = por %p138, %p139
      %p141 = scmp.le.s32.totalorder 1, %s13
      %p142 = scmp.lt.s32.totalorder %s13, 3
      %p143 = pnand %p141, %p142
      %p144 = pneg %p143
      // Predicated region
      $region9: #{tpu_custom_call.1} parent=5 // pred_check
        _
      $region10: #{tpu_custom_call.1} parent=5 // pred_check_branch
        %146 = sbr.rel (%p143) target = $region12
      $region11: #{tpu_custom_call.1} parent=5 // pred_region
        %s147 = ssub.s32 %s13, 1
        // Predicated region
        $region13: #{tpu_custom_call.1} parent=11 // pred_check
          %p148 = pneg %p86
        $region14: #{tpu_custom_call.1} parent=11 // pred_check_branch
          %150 = sbr.rel (%p148) target = $region16
        $region15: #{tpu_custom_call.1} parent=11 // pred_region
          _
        $region16: #{tpu_custom_call.1} parent=11 // pred_fallthru
          _
        // Predicated region
        $region17: #{tpu_custom_call.1} parent=11 // pred_check
          %p151 = pneg %p107
        $region18: #{tpu_custom_call.1} parent=11 // pred_check_branch
          %153 = sbr.rel (%p151) target = $region20
        $region19: #{tpu_custom_call.1} parent=11 // pred_region
          _
        $region20: #{tpu_custom_call.1} parent=11 // pred_fallthru
          _
      $region12: #{tpu_custom_call.1} parent=5 // pred_fallthru
        _
      %p154 = scmp.lt.s32.totalorder %s13, 2
      // Predicated region
      $region21: #{tpu_custom_call.1} parent=5 // pred_check
        %p155 = pneg %p154
      $region22: #{tpu_custom_call.1} parent=5 // pred_check_branch
        %157 = sbr.rel (%p155) target = $region24
      $region23: #{tpu_custom_call.1} parent=5 // pred_region
        // Predicated region
        $region25: #{tpu_custom_call.1} parent=23 // pred_check
          %p158 = pneg %p33
        $region26: #{tpu_custom_call.1} parent=23 // pred_check_branch
          %160 = sbr.rel (%p158) target = $region28
        $region27: #{tpu_custom_call.1} parent=23 // pred_region
          %p161 = scmp.lt.s32.totalorder %s13, 1
          %s162 = scalar_select %p161, %s13, 1
          %s163 = smul.addr %s162, 8
          %s164 = scalar_lea.vmem %s0, %s163
        $region28: #{tpu_custom_call.1} parent=23 // pred_fallthru
          _
        // Predicated region
        $region29: #{tpu_custom_call.1} parent=23 // pred_check
          %p165 = pneg %p59
        $region30: #{tpu_custom_call.1} parent=23 // pred_check_branch
          %167 = sbr.rel (%p165) target = $region32
        $region31: #{tpu_custom_call.1} parent=23 // pred_region
          %p168 = scmp.lt.s32.totalorder %s13, 1
          %s169 = scalar_select %p168, %s13, 1
          %s170 = smul.addr %s169, 8
          %s171 = scalar_lea.vmem %s1, %s170
        $region32: #{tpu_custom_call.1} parent=23 // pred_fallthru
          _
      $region24: #{tpu_custom_call.1} parent=5 // pred_fallthru
        _
      %p172 = scmp.le.s32.totalorder 1, %s13
      %p173 = scmp.lt.s32.totalorder %s13, 3
      %p174 = pnand %p172, %p173
      %p175 = pneg %p174
      // Predicated region
      $region33: #{tpu_custom_call.1} parent=5 // pred_check
        _
      $region34: #{tpu_custom_call.1} parent=5 // pred_check_branch
        %177 = sbr.rel (%p174) target = $region36
      $region35: #{tpu_custom_call.1} parent=5 // pred_region
        %s178 = ssub.s32 %s13, 1
        %p179 = scmp.lt.s32.totalorder %s18, 1
        %s180 = scalar_select %p179, %s18, 1
        %s181 = smul.addr %s180, 8
        %s182 = scalar_lea.vmem %s0, %s181
        %p183 = pneg %p39
        %p184 = pneg %p36
        %p185 = scmp.lt.s32.totalorder %s18, 1
        %s186 = scalar_select %p185, %s18, 1
        %s187 = smul.addr %s186, 8
        %s188 = scalar_lea.vmem %s1, %s187
        %p189 = pneg %p65
        %p190 = pneg %p62
        %p191 = pneg %p86
        %p192 = pneg %p83
        %p193 = pneg %p107
        %p194 = pneg %p104
        %p195 = pneg %p133
        %p196 = pneg %p130
        %s197 = sand.u32 %s120, 1
        %s198 = scalar_lea.sflag [#allocation4], %s197
        %s199 = sand.u32 %s120, 1
        %s200 = smul.addr %s199, 8
        %s201 = scalar_lea.vmem [#allocation3], %s200
        %p202 = scmp.lt.s32.totalorder %s18, 1
        %s203 = scalar_select %p202, %s18, 1
        %s204 = smul.addr %s203, 8
        %s205 = scalar_lea.vmem %s0, %s204
        %p206 = scmp.lt.s32.totalorder %s18, 1
        %s207 = scalar_select %p206, %s18, 1
        %s208 = smul.addr %s207, 8
        %s209 = scalar_lea.vmem %s1, %s208
        %v210 = vld [vmem:[%s2] sm:$0xff]
        %v211 = vld [vmem:[%s2 + $0x8] sm:$0xff]
        %v212 = vld [vmem:[%s2 + $0x10] sm:$0xff]
        %v213 = vld [vmem:[%s2 + $0x18] sm:$0xff]
        %v214 = vld [vmem:[%s2 + $0x20] sm:$0xff]
        %v215 = vld [vmem:[%s2 + $0x28] sm:$0xff]
        %v216 = vld [vmem:[%s2 + $0x30] sm:$0xff]
        %v217 = vld [vmem:[%s2 + $0x38] sm:$0xff]
        %v218 = vld [vmem:[%s2 + $0x40] sm:$0xff]
        %v219 = vld [vmem:[%s2 + $0x48] sm:$0xff]
        %v220 = vld [vmem:[%s2 + $0x50] sm:$0xff]
        %v221 = vld [vmem:[%s2 + $0x58] sm:$0xff]
        %v222 = vld [vmem:[%s2 + $0x60] sm:$0xff]
        %v223 = vld [vmem:[%s2 + $0x68] sm:$0xff]
        %v224 = vld [vmem:[%s2 + $0x70] sm:$0xff]
        %v225 = vld [vmem:[%s2 + $0x78] sm:$0xff]
        %v226 = vld [vmem:[%s3] sm:$0xff]
        %v227 = vld [vmem:[%s3 + $0x8] sm:$0xff]
        %v228 = vld [vmem:[%s3 + $0x10] sm:$0xff]
        %v229 = vld [vmem:[%s3 + $0x18] sm:$0xff]
        %v230 = vld [vmem:[%s3 + $0x20] sm:$0xff]
        %v231 = vld [vmem:[%s3 + $0x28] sm:$0xff]
        %v232 = vld [vmem:[%s3 + $0x30] sm:$0xff]
        %v233 = vld [vmem:[%s3 + $0x38] sm:$0xff]
        %v234 = vld [vmem:[%s3 + $0x40] sm:$0xff]
        %v235 = vld [vmem:[%s3 + $0x48] sm:$0xff]
        %v236 = vld [vmem:[%s3 + $0x50] sm:$0xff]
        %v237 = vld [vmem:[%s3 + $0x58] sm:$0xff]
        %v238 = vld [vmem:[%s3 + $0x60] sm:$0xff]
        %v239 = vld [vmem:[%s3 + $0x68] sm:$0xff]
        %v240 = vld [vmem:[%s3 + $0x70] sm:$0xff]
        %v241 = vld [vmem:[%s3 + $0x78] sm:$0xff]
        %v242 = vld [vmem:[%s205] sm:$0xff]
        %v243 = vld [vmem:[%s209] sm:$0xff]
        %244 = vst [vmem:[#allocation2] sm:$0xff] %v242
        %vm245 = vcmask 523264
        %246 = vst.msk [vmem:[#allocation2 + $0x8] sm:$0xff] %vm245, %v243
        %v247 = vld [vmem:[#allocation2] sm:$0xff]
        %v248 = vld [vmem:[#allocation2 + $0x8] sm:$0xff]
        %250 = vset.pattern.permute.xlu0 0
        %251 = vperm.xlu0 %250, %v226
        %v252 = vpop.permute.xlu0 %251
        %255 = vset.pattern.permute.xlu0 0
        %256 = vperm.xlu0 %255, %v227
        %v257 = vpop.permute.xlu0 %256
        %260 = vset.pattern.permute.xlu0 0
        %261 = vperm.xlu0 %260, %v228
        %v262 = vpop.permute.xlu0 %261
        %265 = vset.pattern.permute.xlu0 0
        %266 = vperm.xlu0 %265, %v229
        %v267 = vpop.permute.xlu0 %266
        %270 = vset.pattern.permute.xlu0 0
        %271 = vperm.xlu0 %270, %v230
        %v272 = vpop.permute.xlu0 %271
        %275 = vset.pattern.permute.xlu0 0
        %276 = vperm.xlu0 %275, %v231
        %v277 = vpop.permute.xlu0 %276
        %280 = vset.pattern.permute.xlu0 0
        %281 = vperm.xlu0 %280, %v232
        %v282 = vpop.permute.xlu0 %281
        %285 = vset.pattern.permute.xlu0 0
        %286 = vperm.xlu0 %285, %v233
        %v287 = vpop.permute.xlu0 %286
        %290 = vset.pattern.permute.xlu0 0
        %291 = vperm.xlu0 %290, %v234
        %v292 = vpop.permute.xlu0 %291
        %295 = vset.pattern.permute.xlu0 0
        %296 = vperm.xlu0 %295, %v235
        %v297 = vpop.permute.xlu0 %296
        %300 = vset.pattern.permute.xlu0 0
        %301 = vperm.xlu0 %300, %v236
        %v302 = vpop.permute.xlu0 %301
        %305 = vset.pattern.permute.xlu0 0
        %306 = vperm.xlu0 %305, %v237
        %v307 = vpop.permute.xlu0 %306
        %310 = vset.pattern.permute.xlu0 0
        %311 = vperm.xlu0 %310, %v238
        %v312 = vpop.permute.xlu0 %311
        %315 = vset.pattern.permute.xlu0 0
        %316 = vperm.xlu0 %315, %v239
        %v317 = vpop.permute.xlu0 %316
        %320 = vset.pattern.permute.xlu0 0
        %321 = vperm.xlu0 %320, %v240
        %v322 = vpop.permute.xlu0 %321
        %325 = vset.pattern.permute.xlu0 0
        %326 = vperm.xlu0 %325, %v241
        %v327 = vpop.permute.xlu0 %326
        %vm329 = vcmask 64512
        %v331 = vsel %vm329, %v210, 0
        %v334 = vsel %vm329, %v211, 0
        %v337 = vsel %vm329, %v212, 0
        %v340 = vsel %vm329, %v213, 0
        %v343 = vsel %vm329, %v214, 0
        %v346 = vsel %vm329, %v215, 0
        %v349 = vsel %vm329, %v216, 0
        %v352 = vsel %vm329, %v217, 0
        %v355 = vsel %vm329, %v218, 0
        %v358 = vsel %vm329, %v219, 0
        %v361 = vsel %vm329, %v220, 0
        %v364 = vsel %vm329, %v221, 0
        %v367 = vsel %vm329, %v222, 0
        %v370 = vsel %vm329, %v223, 0
        %v373 = vsel %vm329, %v224, 0
        %v376 = vsel %vm329, %v225, 0
        %378 = vmatprep.subr.mxu0 0.0
        %379 = vmatpush1.msra.mxu0 0.0
        %380 = vmatprep.subr.mxu0 0.0
        %381 = vmatpush1.msra.mxu0 0.0
        %382 = vmatprep.subr.mxu0 0.0
        %383 = vmatpush1.msra.mxu0 0.0
        %384 = vmatprep.subr.mxu0 0.0
        %385 = vmatpush1.msra.mxu0 0.0
        %386 = vmatprep.subr.mxu0 0.0
        %387 = vmatpush1.msra.mxu0 0.0
        %388 = vmatprep.subr.mxu0 0.0
        %389 = vmatpush1.msra.mxu0 0.0
        %390 = vmatprep.subr.mxu0 0.0
        %391 = vmatpush1.msra.mxu0 0.0
        %392 = vmatprep.subr.mxu0 0.0
        %393 = vmatpush1.msra.mxu0 0.0
        %394 = vmatprep.subr.mxu0 0.0
        %395 = vmatpush1.msra.mxu0 0.0
        %396 = vmatprep.subr.mxu0 0.0
        %397 = vmatpush1.msra.mxu0 0.0
        %398 = vmatprep.subr.mxu0 0.0
        %399 = vmatpush1.msra.mxu0 0.0
        %400 = vmatprep.subr.mxu0 0.0
        %401 = vmatpush1.msra.mxu0 0.0
        %402 = vmatprep.subr.mxu0 0.0
        %403 = vmatpush1.msra.mxu0 0.0
        %404 = vmatprep.subr.mxu0 0.0
        %405 = vmatpush1.msra.mxu0 0.0
        %406 = vmatprep.subr.mxu0 0.0
        %407 = vmatpush1.msra.mxu0 0.0
        %408 = vmatprep.subr.mxu0 %v248
        %409 = vmatpush1.msra.mxu0 %v247
        %410 = vmatprep.subr.mxu0 0.0
        %411 = vmatpush2.msra.mxu0 0.0
        %412 = vmatprep.subr.mxu0 0.0
        %413 = vmatpush2.msra.mxu0 0.0
        %414 = vmatprep.subr.mxu0 0.0
        %415 = vmatpush2.msra.mxu0 0.0
        %416 = vmatprep.subr.mxu0 0.0
        %417 = vmatpush2.msra.mxu0 0.0
        %418 = vmatprep.subr.mxu0 0.0
        %419 = vmatpush2.msra.mxu0 0.0
        %420 = vmatprep.subr.mxu0 0.0
        %421 = vmatpush2.msra.mxu0 0.0
        %422 = vmatprep.subr.mxu0 0.0
        %423 = vmatpush2.msra.mxu0 0.0
        %424 = vmatprep.subr.mxu0 0.0
        %425 = vmatpush2.msra.mxu0 0.0
        %426 = vmatprep.subr.mxu0 0.0
        %427 = vmatpush2.msra.mxu0 0.0
        %428 = vmatprep.subr.mxu0 0.0
        %429 = vmatpush2.msra.mxu0 0.0
        %430 = vmatprep.subr.mxu0 0.0
        %431 = vmatpush2.msra.mxu0 0.0
        %432 = vmatprep.subr.mxu0 0.0
        %433 = vmatpush2.msra.mxu0 0.0
        %434 = vmatprep.subr.mxu0 0.0
        %435 = vmatpush2.msra.mxu0 0.0
        %436 = vmatprep.subr.mxu0 0.0
        %437 = vmatpush2.msra.mxu0 0.0
        %438 = vmatprep.subr.mxu0 0.0
        %439 = vmatpush2.msra.mxu0 0.0
        %440 = vmatprep.subr.mxu0 0.0
        %441 = vmatpush2.msra.mxu0 0.0
        %442 = vmatprep.mubr.f32.mxu0 0.0
        %443 = vmatmul.mubr.f32.gmra.mxu0 %v331
        %v444 = vpop.f32.mrf.mxu0
        %v445 = vadd.f32 %v252, %v444
        %v446 = vpop.f32.mrf.mxu0
        %447 = vmatprep.mubr.f32.mxu0 0.0
        %448 = vmatmul.mubr.f32.gmra.mxu0 %v334
        %v449 = vpop.f32.mrf.mxu0
        %v450 = vadd.f32 %v257, %v449
        %v451 = vpop.f32.mrf.mxu0
        %452 = vmatprep.mubr.f32.mxu0 0.0
        %453 = vmatmul.mubr.f32.gmra.mxu0 %v337
        %v454 = vpop.f32.mrf.mxu0
        %v455 = vadd.f32 %v262, %v454
        %v456 = vpop.f32.mrf.mxu0
        %457 = vmatprep.mubr.f32.mxu0 0.0
        %458 = vmatmul.mubr.f32.gmra.mxu0 %v340
        %v459 = vpop.f32.mrf.mxu0
        %v460 = vadd.f32 %v267, %v459
        %v461 = vpop.f32.mrf.mxu0
        %462 = vmatprep.mubr.f32.mxu0 0.0
        %463 = vmatmul.mubr.f32.gmra.mxu0 %v343
        %v464 = vpop.f32.mrf.mxu0
        %v465 = vadd.f32 %v272, %v464
        %v466 = vpop.f32.mrf.mxu0
        %467 = vmatprep.mubr.f32.mxu0 0.0
        %468 = vmatmul.mubr.f32.gmra.mxu0 %v346
        %v469 = vpop.f32.mrf.mxu0
        %v470 = vadd.f32 %v277, %v469
        %v471 = vpop.f32.mrf.mxu0
        %472 = vmatprep.mubr.f32.mxu0 0.0
        %473 = vmatmul.mubr.f32.gmra.mxu0 %v349
        %v474 = vpop.f32.mrf.mxu0
        %v475 = vadd.f32 %v282, %v474
        %v476 = vpop.f32.mrf.mxu0
        %477 = vmatprep.mubr.f32.mxu0 0.0
        %478 = vmatmul.mubr.f32.gmra.mxu0 %v352
        %v479 = vpop.f32.mrf.mxu0
        %v480 = vadd.f32 %v287, %v479
        %v481 = vpop.f32.mrf.mxu0
        %482 = vmatprep.mubr.f32.mxu0 0.0
        %483 = vmatmul.mubr.f32.gmra.mxu0 %v355
        %v484 = vpop.f32.mrf.mxu0
        %v485 = vpop.f32.mrf.mxu0
        %v486 = vadd.f32 %v292, %v485
        %487 = vmatprep.mubr.f32.mxu0 0.0
        %488 = vmatmul.mubr.f32.gmra.mxu0 %v358
        %v489 = vpop.f32.mrf.mxu0
        %v490 = vpop.f32.mrf.mxu0
        %v491 = vadd.f32 %v297, %v490
        %492 = vmatprep.mubr.f32.mxu0 0.0
        %493 = vmatmul.mubr.f32.gmra.mxu0 %v361
        %v494 = vpop.f32.mrf.mxu0
        %v495 = vpop.f32.mrf.mxu0
        %v496 = vadd.f32 %v302, %v495
        %497 = vmatprep.mubr.f32.mxu0 0.0
        %498 = vmatmul.mubr.f32.gmra.mxu0 %v364
        %v499 = vpop.f32.mrf.mxu0
        %v500 = vpop.f32.mrf.mxu0
        %v501 = vadd.f32 %v307, %v500
        %502 = vmatprep.mubr.f32.mxu0 0.0
        %503 = vmatmul.mubr.f32.gmra.mxu0 %v367
        %v504 = vpop.f32.mrf.mxu0
        %v505 = vpop.f32.mrf.mxu0
        %v506 = vadd.f32 %v312, %v505
        %507 = vmatprep.mubr.f32.mxu0 0.0
        %508 = vmatmul.mubr.f32.gmra.mxu0 %v370
        %v509 = vpop.f32.mrf.mxu0
        %v510 = vpop.f32.mrf.mxu0
        %v511 = vadd.f32 %v317, %v510
        %512 = vmatprep.mubr.f32.mxu0 0.0
        %513 = vmatmul.mubr.f32.gmra.mxu0 %v373
        %v514 = vpop.f32.mrf.mxu0
        %v515 = vpop.f32.mrf.mxu0
        %v516 = vadd.f32 %v322, %v515
        %517 = vmatprep.mubr.f32.mxu0 0.0
        %518 = vmatmul.mubr.f32.gmra.mxu0 %v376
        %v519 = vpop.f32.mrf.mxu0
        %v520 = vpop.f32.mrf.mxu0
        %v521 = vadd.f32 %v327, %v520
        %522 = vdwg.mxu0
        %v523 = vmax.f32 %v445, 0.0
        %v524 = vmax.f32 %v450, 0.0
        %v525 = vmax.f32 %v455, 0.0
        %v526 = vmax.f32 %v460, 0.0
        %v527 = vmax.f32 %v465, 0.0
        %v528 = vmax.f32 %v470, 0.0
        %v529 = vmax.f32 %v475, 0.0
        %v530 = vmax.f32 %v480, 0.0
        %v531 = vmax.f32 %v486, 0.0
        %v532 = vmax.f32 %v491, 0.0
        %v533 = vmax.f32 %v496, 0.0
        %v534 = vmax.f32 %v501, 0.0
        %v535 = vmax.f32 %v506, 0.0
        %v536 = vmax.f32 %v511, 0.0
        %v537 = vmax.f32 %v516, 0.0
        %v538 = vmax.f32 %v521, 0.0
        %v539 = vmul.f32 %v523, %v523
        %v540 = vmul.f32 %v524, %v524
        %v541 = vmul.f32 %v525, %v525
        %v542 = vmul.f32 %v526, %v526
        %v543 = vmul.f32 %v527, %v527
        %v544 = vmul.f32 %v528, %v528
        %v545 = vmul.f32 %v529, %v529
        %v546 = vmul.f32 %v530, %v530
        %547 = vadd.xlane.f32.xlu0 %v539
        %v548 = vpop.xlane.xlu0 %547
        %549 = vadd.xlane.f32.xlu0 %v540
        %v550 = vpop.xlane.xlu0 %549
        %551 = vadd.xlane.f32.xlu0 %v541
        %v552 = vpop.xlane.xlu0 %551
        %553 = vadd.xlane.f32.xlu0 %v542
        %v554 = vpop.xlane.xlu0 %553
        %555 = vadd.xlane.f32.xlu0 %v543
        %v556 = vpop.xlane.xlu0 %555
        %557 = vadd.xlane.f32.xlu0 %v544
        %v558 = vpop.xlane.xlu0 %557
        %559 = vadd.xlane.f32.xlu0 %v545
        %v560 = vpop.xlane.xlu0 %559
        %561 = vadd.xlane.f32.xlu0 %v546
        %v562 = vpop.xlane.xlu0 %561
        %v563 = vmax.f32 %v548, 1e-24
        %v564 = vmax.f32 %v550, 1e-24
        %v565 = vmax.f32 %v552, 1e-24
        %v566 = vmax.f32 %v554, 1e-24
        %v567 = vmax.f32 %v556, 1e-24
        %v568 = vmax.f32 %v558, 1e-24
        %v569 = vmax.f32 %v560, 1e-24
        %v570 = vmax.f32 %v562, 1e-24
        %v571 = vrsqrt.pop %v563
        %v572 = vrsqrt.pop %v564
        %v573 = vrsqrt.pop %v565
        %v574 = vrsqrt.pop %v566
        %v575 = vrsqrt.pop %v567
        %v576 = vrsqrt.pop %v568
        %v577 = vrsqrt.pop %v569
        %v578 = vrsqrt.pop %v570
        %v579 = vmul.f32 %v523, %v571
        %v580 = vmul.f32 %v524, %v572
        %v581 = vmul.f32 %v525, %v573
        %v582 = vmul.f32 %v526, %v574
        %v583 = vmul.f32 %v527, %v575
        %v584 = vmul.f32 %v528, %v576
        %v585 = vmul.f32 %v529, %v577
        %v586 = vmul.f32 %v530, %v578
        %587 = vmatprep.subr.mxu0 0.0
        %588 = vmatpush1.xpose.msra.mxu0 0.0
        %589 = vmatprep.subr.mxu0 0.0
        %590 = vmatpush1.xpose.msra.mxu0 0.0
        %591 = vmatprep.subr.mxu0 0.0
        %592 = vmatpush1.xpose.msra.mxu0 0.0
        %593 = vmatprep.subr.mxu0 0.0
        %594 = vmatpush1.xpose.msra.mxu0 0.0
        %595 = vmatprep.subr.mxu0 0.0
        %596 = vmatpush1.xpose.msra.mxu0 0.0
        %597 = vmatprep.subr.mxu0 0.0
        %598 = vmatpush1.xpose.msra.mxu0 0.0
        %599 = vmatprep.subr.mxu0 0.0
        %600 = vmatpush1.xpose.msra.mxu0 0.0
        %601 = vmatprep.subr.mxu0 0.0
        %602 = vmatpush1.xpose.msra.mxu0 0.0
        %603 = vmatprep.subr.mxu0 0.0
        %604 = vmatpush1.xpose.msra.mxu0 %v586
        %605 = vmatprep.subr.mxu0 0.0
        %606 = vmatpush1.xpose.msra.mxu0 %v585
        %607 = vmatprep.subr.mxu0 0.0
        %608 = vmatpush1.xpose.msra.mxu0 %v584
        %609 = vmatprep.subr.mxu0 0.0
        %610 = vmatpush1.xpose.msra.mxu0 %v583
        %611 = vmatprep.subr.mxu0 0.0
        %612 = vmatpush1.xpose.msra.mxu0 %v582
        %613 = vmatprep.subr.mxu0 0.0
        %614 = vmatpush1.xpose.msra.mxu0 %v581
        %615 = vmatprep.subr.mxu0 0.0
        %616 = vmatpush1.xpose.msra.mxu0 %v580
        %617 = vmatprep.subr.mxu0 0.0
        %618 = vmatpush1.xpose.msra.mxu0 %v579
        %619 = vmatprep.subr.mxu0 0.0
        %620 = vmatpush2.xpose.msra.mxu0 0.0
        %621 = vmatprep.subr.mxu0 0.0
        %622 = vmatpush2.xpose.msra.mxu0 0.0
        %623 = vmatprep.subr.mxu0 0.0
        %624 = vmatpush2.xpose.msra.mxu0 0.0
        %625 = vmatprep.subr.mxu0 0.0
        %626 = vmatpush2.xpose.msra.mxu0 0.0
        %627 = vmatprep.subr.mxu0 0.0
        %628 = vmatpush2.xpose.msra.mxu0 0.0
        %629 = vmatprep.subr.mxu0 0.0
        %630 = vmatpush2.xpose.msra.mxu0 0.0
        %631 = vmatprep.subr.mxu0 0.0
        %632 = vmatpush2.xpose.msra.mxu0 0.0
        %633 = vmatprep.subr.mxu0 0.0
        %634 = vmatpush2.xpose.msra.mxu0 0.0
        %635 = vmatprep.subr.mxu0 0.0
        %636 = vmatpush2.xpose.msra.mxu0 0.0
        %637 = vmatprep.subr.mxu0 0.0
        %638 = vmatpush2.xpose.msra.mxu0 0.0
        %639 = vmatprep.subr.mxu0 0.0
        %640 = vmatpush2.xpose.msra.mxu0 0.0
        %641 = vmatprep.subr.mxu0 0.0
        %642 = vmatpush2.xpose.msra.mxu0 0.0
        %643 = vmatprep.subr.mxu0 0.0
        %644 = vmatpush2.xpose.msra.mxu0 0.0
        %645 = vmatprep.subr.mxu0 0.0
        %646 = vmatpush2.xpose.msra.mxu0 0.0
        %647 = vmatprep.subr.mxu0 0.0
        %648 = vmatpush2.xpose.msra.mxu0 0.0
        %649 = vmatprep.subr.mxu0 0.0
        %650 = vmatpush2.xpose.msra.mxu0 0.0
        %651 = vmatprep.mubr.f32.mxu0 0.0
        %652 = vmatmul.mubr.f32.gmra.mxu0 %v242
        %v653 = vpop.f32.mrf.mxu0
        %v654 = vadd.f32 0.0, %v653
        %v655 = vpop.f32.mrf.mxu0
        %656 = vdwg.mxu0
        %v657 = vmul.f32 %v654, %v654
        %v658 = vsel %vm245, %v657, 0.0
        %v659 = vrot.slane %v658, 4
        %v660 = vadd.f32 %v658, %v659
        %v661 = vrot.slane %v660, 2
        %v662 = vadd.f32 %v660, %v661
        %v663 = vrot.slane %v662, 1
        %v664 = vadd.f32 %v662, %v663
        %v665 = vmax.f32 %v664, 1e-24
        %v666 = vrsqrt.pop %v665
        %v667 = vmul.f32 %v654, %v666
        %668 = vxpose.xlu0.b32.start [1/16] %v667, 128
        %669 = vxpose.xlu0.b32.cont [2/16] 0.0, 128
        %670 = vxpose.xlu0.b32.cont [3/16] 0.0, 128
        %671 = vxpose.xlu0.b32.cont [4/16] 0.0, 128
        %672 = vxpose.xlu0.b32.cont [5/16] 0.0, 128
        %673 = vxpose.xlu0.b32.cont [6/16] 0.0, 128
        %674 = vxpose.xlu0.b32.cont [7/16] 0.0, 128
        %675 = vxpose.xlu0.b32.cont [8/16] 0.0, 128
        %676 = vxpose.xlu0.b32.cont [9/16] 0.0, 128
        %677 = vxpose.xlu0.b32.cont [10/16] 0.0, 128
        %678 = vxpose.xlu0.b32.cont [11/16] 0.0, 128
        %679 = vxpose.xlu0.b32.cont [12/16] 0.0, 128
        %680 = vxpose.xlu0.b32.cont [13/16] 0.0, 128
        %681 = vxpose.xlu0.b32.cont [14/16] 0.0, 128
        %682 = vxpose.xlu0.b32.cont [15/16] 0.0, 128
        %683 = vxpose.xlu0.b32.end [16/16] 0.0, 128
        %v684 = vpop.trf.xlu0
        %v685 = vpop.trf.xlu0
        %v686 = vpop.trf.xlu0
        %v687 = vpop.trf.xlu0
        %v688 = vpop.trf.xlu0
        %v689 = vpop.trf.xlu0
        %v690 = vpop.trf.xlu0
        %v691 = vpop.trf.xlu0
        %v692 = vpop.trf.xlu0
        %v693 = vpop.trf.xlu0
        %v694 = vpop.trf.xlu0
        %v695 = vpop.trf.xlu0
        %v696 = vpop.trf.xlu0
        %v697 = vpop.trf.xlu0
        %v698 = vpop.trf.xlu0
        %v699 = vpop.trf.xlu0
        %v701 = vsel %vm329, %v684, 0
        %v704 = vsel %vm329, %v685, 0
        %v707 = vsel %vm329, %v686, 0
        %v710 = vsel %vm329, %v687, 0
        %v713 = vsel %vm329, %v688, 0
        %v716 = vsel %vm329, %v689, 0
        %v719 = vsel %vm329, %v690, 0
        %v722 = vsel %vm329, %v691, 0
        %724 = vmatprep.subr.mxu0 0.0
        %725 = vmatpush1.msra.mxu0 0.0
        %726 = vmatprep.subr.mxu0 0.0
        %727 = vmatpush1.msra.mxu0 0.0
        %728 = vmatprep.subr.mxu0 0.0
        %729 = vmatpush1.msra.mxu0 0.0
        %730 = vmatprep.subr.mxu0 0.0
        %731 = vmatpush1.msra.mxu0 0.0
        %732 = vmatprep.subr.mxu0 0.0
        %733 = vmatpush1.msra.mxu0 0.0
        %734 = vmatprep.subr.mxu0 0.0
        %735 = vmatpush1.msra.mxu0 0.0
        %736 = vmatprep.subr.mxu0 0.0
        %737 = vmatpush1.msra.mxu0 0.0
        %738 = vmatprep.subr.mxu0 0.0
        %739 = vmatpush1.msra.mxu0 0.0
        %740 = vmatprep.subr.mxu0 0.0
        %741 = vmatpush1.msra.mxu0 0.0
        %742 = vmatprep.subr.mxu0 0.0
        %743 = vmatpush1.msra.mxu0 0.0
        %744 = vmatprep.subr.mxu0 0.0
        %745 = vmatpush1.msra.mxu0 0.0
        %746 = vmatprep.subr.mxu0 0.0
        %747 = vmatpush1.msra.mxu0 0.0
        %748 = vmatprep.subr.mxu0 0.0
        %749 = vmatpush1.msra.mxu0 0.0
        %750 = vmatprep.subr.mxu0 0.0
        %751 = vmatpush1.msra.mxu0 0.0
        %752 = vmatprep.subr.mxu0 0.0
        %753 = vmatpush1.msra.mxu0 0.0
        %754 = vmatprep.subr.mxu0 0.0
        %755 = vmatpush1.msra.mxu0 %v667
        %756 = vmatprep.subr.mxu0 0.0
        %757 = vmatpush2.msra.mxu0 0.0
        %758 = vmatprep.subr.mxu0 0.0
        %759 = vmatpush2.msra.mxu0 0.0
        %760 = vmatprep.subr.mxu0 0.0
        %761 = vmatpush2.msra.mxu0 0.0
        %762 = vmatprep.subr.mxu0 0.0
        %763 = vmatpush2.msra.mxu0 0.0
        %764 = vmatprep.subr.mxu0 0.0
        %765 = vmatpush2.msra.mxu0 0.0
        %766 = vmatprep.subr.mxu0 0.0
        %767 = vmatpush2.msra.mxu0 0.0
        %768 = vmatprep.subr.mxu0 0.0
        %769 = vmatpush2.msra.mxu0 0.0
        %770 = vmatprep.subr.mxu0 0.0
        %771 = vmatpush2.msra.mxu0 0.0
        %772 = vmatprep.subr.mxu0 0.0
        %773 = vmatpush2.msra.mxu0 0.0
        %774 = vmatprep.subr.mxu0 0.0
        %775 = vmatpush2.msra.mxu0 0.0
        %776 = vmatprep.subr.mxu0 0.0
        %777 = vmatpush2.msra.mxu0 0.0
        %778 = vmatprep.subr.mxu0 0.0
        %779 = vmatpush2.msra.mxu0 0.0
        %780 = vmatprep.subr.mxu0 0.0
        %781 = vmatpush2.msra.mxu0 0.0
        %782 = vmatprep.subr.mxu0 0.0
        %783 = vmatpush2.msra.mxu0 0.0
        %784 = vmatprep.subr.mxu0 0.0
        %785 = vmatpush2.msra.mxu0 0.0
        %786 = vmatprep.subr.mxu0 0.0
        %787 = vmatpush2.msra.mxu0 0.0
        %788 = vmatprep.mubr.f32.mxu0 0.0
        %789 = vmatmul.mubr.f32.gmra.mxu0 %v701
        %v790 = vpop.f32.mrf.mxu0
        %v791 = vadd.f32 0.0, %v790
        %v792 = vpop.f32.mrf.mxu0
        %793 = vmatprep.mubr.f32.mxu0 0.0
        %794 = vmatmul.mubr.f32.gmra.mxu0 %v704
        %v795 = vpop.f32.mrf.mxu0
        %v796 = vadd.f32 0.0, %v795
        %v797 = vpop.f32.mrf.mxu0
        %798 = vmatprep.mubr.f32.mxu0 0.0
        %799 = vmatmul.mubr.f32.gmra.mxu0 %v707
        %v800 = vpop.f32.mrf.mxu0
        %v801 = vadd.f32 0.0, %v800
        %v802 = vpop.f32.mrf.mxu0
        %803 = vmatprep.mubr.f32.mxu0 0.0
        %804 = vmatmul.mubr.f32.gmra.mxu0 %v710
        %v805 = vpop.f32.mrf.mxu0
        %v806 = vadd.f32 0.0, %v805
        %v807 = vpop.f32.mrf.mxu0
        %808 = vmatprep.mubr.f32.mxu0 0.0
        %809 = vmatmul.mubr.f32.gmra.mxu0 %v713
        %v810 = vpop.f32.mrf.mxu0
        %v811 = vadd.f32 0.0, %v810
        %v812 = vpop.f32.mrf.mxu0
        %813 = vmatprep.mubr.f32.mxu0 0.0
        %814 = vmatmul.mubr.f32.gmra.mxu0 %v716
        %v815 = vpop.f32.mrf.mxu0
        %v816 = vadd.f32 0.0, %v815
        %v817 = vpop.f32.mrf.mxu0
        %818 = vmatprep.mubr.f32.mxu0 0.0
        %819 = vmatmul.mubr.f32.gmra.mxu0 %v719
        %v820 = vpop.f32.mrf.mxu0
        %v821 = vadd.f32 0.0, %v820
        %v822 = vpop.f32.mrf.mxu0
        %823 = vmatprep.mubr.f32.mxu0 0.0
        %824 = vmatmul.mubr.f32.gmra.mxu0 %v722
        %v825 = vpop.f32.mrf.mxu0
        %v826 = vadd.f32 0.0, %v825
        %v827 = vpop.f32.mrf.mxu0
        %828 = vdwg.mxu0
        %v829 = vmul.f32 %v791, 1.442695
        %v830 = vpow.pop %v829
        %v831 = vmul.f32 %v796, 1.442695
        %v832 = vpow.pop %v831
        %v833 = vmul.f32 %v801, 1.442695
        %v834 = vpow.pop %v833
        %v835 = vmul.f32 %v806, 1.442695
        %v836 = vpow.pop %v835
        %v837 = vmul.f32 %v811, 1.442695
        %v838 = vpow.pop %v837
        %v839 = vmul.f32 %v816, 1.442695
        %v840 = vpow.pop %v839
        %v841 = vmul.f32 %v821, 1.442695
        %v842 = vpow.pop %v841
        %v843 = vmul.f32 %v826, 1.442695
        %v844 = vpow.pop %v843
        %v845 = vsel %vm245, %v830, 0.0
        %v846 = vsel %vm245, %v832, 0.0
        %v847 = vadd.f32 %v845, %v846
        %v848 = vsel %vm245, %v834, 0.0
        %v849 = vadd.f32 %v847, %v848
        %v850 = vsel %vm245, %v836, 0.0
        %v851 = vadd.f32 %v849, %v850
        %v852 = vsel %vm245, %v838, 0.0
        %v853 = vadd.f32 %v851, %v852
        %v854 = vsel %vm245, %v840, 0.0
        %v855 = vadd.f32 %v853, %v854
        %v856 = vsel %vm245, %v842, 0.0
        %v857 = vadd.f32 %v855, %v856
        %v858 = vsel %vm245, %v844, 0.0
        %v859 = vadd.f32 %v857, %v858
        %v860 = vrot.slane %v859, 4
        %v861 = vadd.f32 %v859, %v860
        %v862 = vrot.slane %v861, 2
        %v863 = vadd.f32 %v861, %v862
        %v864 = vrot.slane %v863, 1
        %v865 = vadd.f32 %v863, %v864
        %v866 = vrcp.pop %v865
        %v867 = vmul.f32 %v830, %v866
        %v868 = vmul.f32 %v832, %v866
        %v869 = vmul.f32 %v834, %v866
        %v870 = vmul.f32 %v836, %v866
        %v871 = vmul.f32 %v838, %v866
        %v872 = vmul.f32 %v840, %v866
        %v873 = vmul.f32 %v842, %v866
        %v874 = vmul.f32 %v844, %v866
        %v876 = vsel %vm245, %v654, 0
        %878 = vmatprep.subr.mxu0 0.0
        %879 = vmatpush1.msra.mxu0 0.0
        %880 = vmatprep.subr.mxu0 0.0
        %881 = vmatpush1.msra.mxu0 0.0
        %882 = vmatprep.subr.mxu0 0.0
        %883 = vmatpush1.msra.mxu0 0.0
        %884 = vmatprep.subr.mxu0 0.0
        %885 = vmatpush1.msra.mxu0 0.0
        %886 = vmatprep.subr.mxu0 0.0
        %887 = vmatpush1.msra.mxu0 0.0
        %888 = vmatprep.subr.mxu0 0.0
        %889 = vmatpush1.msra.mxu0 0.0
        %890 = vmatprep.subr.mxu0 0.0
        %891 = vmatpush1.msra.mxu0 0.0
        %892 = vmatprep.subr.mxu0 0.0
        %893 = vmatpush1.msra.mxu0 0.0
        %894 = vmatprep.subr.mxu0 0.0
        %895 = vmatpush1.msra.mxu0 %v874
        %896 = vmatprep.subr.mxu0 0.0
        %897 = vmatpush1.msra.mxu0 %v873
        %898 = vmatprep.subr.mxu0 0.0
        %899 = vmatpush1.msra.mxu0 %v872
        %900 = vmatprep.subr.mxu0 0.0
        %901 = vmatpush1.msra.mxu0 %v871
        %902 = vmatprep.subr.mxu0 0.0
        %903 = vmatpush1.msra.mxu0 %v870
        %904 = vmatprep.subr.mxu0 0.0
        %905 = vmatpush1.msra.mxu0 %v869
        %906 = vmatprep.subr.mxu0 0.0
        %907 = vmatpush1.msra.mxu0 %v868
        %908 = vmatprep.subr.mxu0 0.0
        %909 = vmatpush1.msra.mxu0 %v867
        %910 = vmatprep.subr.mxu0 0.0
        %911 = vmatpush2.msra.mxu0 0.0
        %912 = vmatprep.subr.mxu0 0.0
        %913 = vmatpush2.msra.mxu0 0.0
        %914 = vmatprep.subr.mxu0 0.0
        %915 = vmatpush2.msra.mxu0 0.0
        %916 = vmatprep.subr.mxu0 0.0
        %917 = vmatpush2.msra.mxu0 0.0
        %918 = vmatprep.subr.mxu0 0.0
        %919 = vmatpush2.msra.mxu0 0.0
        %920 = vmatprep.subr.mxu0 0.0
        %921 = vmatpush2.msra.mxu0 0.0
        %922 = vmatprep.subr.mxu0 0.0
        %923 = vmatpush2.msra.mxu0 0.0
        %924 = vmatprep.subr.mxu0 0.0
        %925 = vmatpush2.msra.mxu0 0.0
        %926 = vmatprep.subr.mxu0 0.0
        %927 = vmatpush2.msra.mxu0 0.0
        %928 = vmatprep.subr.mxu0 0.0
        %929 = vmatpush2.msra.mxu0 0.0
        %930 = vmatprep.subr.mxu0 0.0
        %931 = vmatpush2.msra.mxu0 0.0
        %932 = vmatprep.subr.mxu0 0.0
        %933 = vmatpush2.msra.mxu0 0.0
        %934 = vmatprep.subr.mxu0 0.0
        %935 = vmatpush2.msra.mxu0 0.0
        %936 = vmatprep.subr.mxu0 0.0
        %937 = vmatpush2.msra.mxu0 0.0
        %938 = vmatprep.subr.mxu0 0.0
        %939 = vmatpush2.msra.mxu0 0.0
        %940 = vmatprep.subr.mxu0 0.0
        %941 = vmatpush2.msra.mxu0 0.0
        %942 = vmatprep.mubr.f32.mxu0 0.0
        %943 = vmatmul.mubr.f32.gmra.mxu0 %v876
        %v944 = vpop.f32.mrf.mxu0
        %v945 = vadd.f32 0.0, %v944
        %v946 = vpop.f32.mrf.mxu0
        %947 = vdwg.mxu0
        %v948 = vmul.f32 %v531, %v531
        %v949 = vmul.f32 %v532, %v532
        %v950 = vmul.f32 %v533, %v533
        %v951 = vmul.f32 %v534, %v534
        %v952 = vmul.f32 %v535, %v535
        %v953 = vmul.f32 %v536, %v536
        %v954 = vmul.f32 %v537, %v537
        %v955 = vmul.f32 %v538, %v538
        %v956 = vsel %vm245, %v948, 0.0
        %v957 = vsel %vm245, %v949, 0.0
        %v958 = vadd.f32 %v956, %v957
        %v959 = vsel %vm245, %v950, 0.0
        %v960 = vadd.f32 %v958, %v959
        %v961 = vsel %vm245, %v951, 0.0
        %v962 = vadd.f32 %v960, %v961
        %v963 = vsel %vm245, %v952, 0.0
        %v964 = vadd.f32 %v962, %v963
        %v965 = vsel %vm245, %v953, 0.0
        %v966 = vadd.f32 %v964, %v965
        %v967 = vsel %vm245, %v954, 0.0
        %v968 = vadd.f32 %v966, %v967
        %v969 = vsel %vm245, %v955, 0.0
        %v970 = vadd.f32 %v968, %v969
        %v971 = vrot.slane %v970, 4
        %v972 = vadd.f32 %v970, %v971
        %v973 = vrot.slane %v972, 2
        %v974 = vadd.f32 %v972, %v973
        %v975 = vrot.slane %v974, 1
        %v976 = vadd.f32 %v974, %v975
        %v977 = vmax.f32 %v976, 1e-24
        %v978 = vrsqrt.pop %v977
        %v980 = vsel %vm245, %v945, 0
        %982 = vmatprep.subr.mxu0 0.0
        %983 = vmatpush1.msra.mxu0 0.0
        %984 = vmatprep.subr.mxu0 0.0
        %985 = vmatpush1.msra.mxu0 0.0
        %986 = vmatprep.subr.mxu0 0.0
        %987 = vmatpush1.msra.mxu0 0.0
        %988 = vmatprep.subr.mxu0 0.0
        %989 = vmatpush1.msra.mxu0 0.0
        %990 = vmatprep.subr.mxu0 0.0
        %991 = vmatpush1.msra.mxu0 0.0
        %992 = vmatprep.subr.mxu0 0.0
        %993 = vmatpush1.msra.mxu0 0.0
        %994 = vmatprep.subr.mxu0 0.0
        %995 = vmatpush1.msra.mxu0 0.0
        %996 = vmatprep.subr.mxu0 0.0
        %997 = vmatpush1.msra.mxu0 0.0
        %998 = vmatprep.subr.mxu0 0.0
        %999 = vmatpush1.msra.mxu0 %v538
        %1000 = vmatprep.subr.mxu0 0.0
        %1001 = vmatpush1.msra.mxu0 %v537
        %1002 = vmatprep.subr.mxu0 0.0
        %1003 = vmatpush1.msra.mxu0 %v536
        %1004 = vmatprep.subr.mxu0 0.0
        %1005 = vmatpush1.msra.mxu0 %v535
        %1006 = vmatprep.subr.mxu0 0.0
        %1007 = vmatpush1.msra.mxu0 %v534
        %1008 = vmatprep.subr.mxu0 0.0
        %1009 = vmatpush1.msra.mxu0 %v533
        %1010 = vmatprep.subr.mxu0 0.0
        %1011 = vmatpush1.msra.mxu0 %v532
        %1012 = vmatprep.subr.mxu0 0.0
        %1013 = vmatpush1.msra.mxu0 %v531
        %1014 = vmatprep.subr.mxu0 0.0
        %1015 = vmatpush2.msra.mxu0 0.0
        %1016 = vmatprep.subr.mxu0 0.0
        %1017 = vmatpush2.msra.mxu0 0.0
        %1018 = vmatprep.subr.mxu0 0.0
        %1019 = vmatpush2.msra.mxu0 0.0
        %1020 = vmatprep.subr.mxu0 0.0
        %1021 = vmatpush2.msra.mxu0 0.0
        %1022 = vmatprep.subr.mxu0 0.0
        %1023 = vmatpush2.msra.mxu0 0.0
        %1024 = vmatprep.subr.mxu0 0.0
        %1025 = vmatpush2.msra.mxu0 0.0
        %1026 = vmatprep.subr.mxu0 0.0
        %1027 = vmatpush2.msra.mxu0 0.0
        %1028 = vmatprep.subr.mxu0 0.0
        %1029 = vmatpush2.msra.mxu0 0.0
        %1030 = vmatprep.subr.mxu0 0.0
        %1031 = vmatpush2.msra.mxu0 0.0
        %1032 = vmatprep.subr.mxu0 0.0
        %1033 = vmatpush2.msra.mxu0 0.0
        %1034 = vmatprep.subr.mxu0 0.0
        %1035 = vmatpush2.msra.mxu0 0.0
        %1036 = vmatprep.subr.mxu0 0.0
        %1037 = vmatpush2.msra.mxu0 0.0
        %1038 = vmatprep.subr.mxu0 0.0
        %1039 = vmatpush2.msra.mxu0 0.0
        %1040 = vmatprep.subr.mxu0 0.0
        %1041 = vmatpush2.msra.mxu0 0.0
        %1042 = vmatprep.subr.mxu0 0.0
        %1043 = vmatpush2.msra.mxu0 0.0
        %1044 = vmatprep.subr.mxu0 0.0
        %1045 = vmatpush2.msra.mxu0 0.0
        %1046 = vmatprep.mubr.f32.mxu0 0.0
        %1047 = vmatmul.mubr.f32.gmra.mxu0 %v980
        %v1048 = vpop.f32.mrf.mxu0
        %v1049 = vadd.f32 0.0, %v1048
        %v1050 = vpop.f32.mrf.mxu0
        %1051 = vdwg.mxu0
        %v1052 = vmul.f32 %v1049, %v978
        %1053 = vst.msk [vmem:[%s201] sm:$0xff] %vm245, %v1052
        %s1054 = sand.u32 %s120, 1
        %s1055 = scalar_lea.sflag [#allocation4], %s1054
        %s1056 = sand.u32 %s120, 1
        %s1057 = smul.addr %s1056, 8
        %s1058 = scalar_lea.vmem [#allocation3], %s1057
        // Predicated region
        $region37: #{tpu_custom_call.1} parent=35 // pred_check
          %p1059 = pneg %p130
        $region38: #{tpu_custom_call.1} parent=35 // pred_check_branch
          %1061 = sbr.rel (%p1059) target = $region40
        $region39: #{tpu_custom_call.1} parent=35 // pred_region
          %s1063 = ssub.s32 128, 128
          %1064 = vsyncadd %s1055, %s1063
          %s1065 = smul.addr %s18, 128
          %s1066 = scalar_lea.hbm %s4, %s1065
          %s1068 = sshll.u32 %s1058, 4
          %s1069 = int_to_ptr.vmem [resolvable:$true] %s1068
          %1071 = dma.vmem_to_hbm [thread:$0]  %s1069, 128, %s1066, %s1055
        $region40: #{tpu_custom_call.1} parent=35 // pred_fallthru
          _
      $region36: #{tpu_custom_call.1} parent=5 // pred_fallthru
        _
      %p1072 = scmp.le.s32.totalorder 2, %s13
      // Predicated region
      $region41: #{tpu_custom_call.1} parent=5 // pred_check
        %p1073 = pneg %p1072
      $region42: #{tpu_custom_call.1} parent=5 // pred_check_branch
        %1075 = sbr.rel (%p1073) target = $region44
      $region43: #{tpu_custom_call.1} parent=5 // pred_region
        %s1076 = ssub.s32 %s13, 2
        // Predicated region
        $region45: #{tpu_custom_call.1} parent=43 // pred_check
          %p1077 = pneg %p136
        $region46: #{tpu_custom_call.1} parent=43 // pred_check_branch
          %1079 = sbr.rel (%p1077) target = $region48
        $region47: #{tpu_custom_call.1} parent=43 // pred_region
          %s1080 = sand.u32 %s121, 1
          %s1081 = scalar_lea.sflag [#allocation4], %s1080
          %s1082 = sand.u32 %s121, 1
          %s1083 = smul.addr %s1082, 8
          %s1084 = scalar_lea.vmem [#allocation3], %s1083
          %1085 = dma.done %s1081, 128
        $region48: #{tpu_custom_call.1} parent=43 // pred_fallthru
          _
      $region44: #{tpu_custom_call.1} parent=5 // pred_fallthru
        _
    $region6: #{tpu_custom_call.1} parent=1 // loop_footer
      %s17 = sadd.s32 1, %s13
    $region7: #{tpu_custom_call.1} parent=1 // loop_footer_branch
      %12 = sbr.rel target = $region3
    $region8: #{tpu_custom_call.1} parent=1 // loop_exit
      _
    %1086 = vsyncpa [#allocation4], 1
    %s1087 = scalar_lea.sflag [#allocation4], 1
    %1088 = vsyncpa %s1087, 1

</llo_original>
